<compile_context>
chip_gen: v7x
topology: tpu7x:2x2x1
jax: 0.10.0
libtpu: 0.0.40
codegen_flags: <defaults>
</compile_context>

<pallas_src>
import functools

import jax
import jax.numpy as jnp
import numpy as np
from jax.experimental import pallas as pl
from jax.experimental.pallas import tpu as pltpu

_TN_MAX = 64 * 1024   # lane tile along the flattened-location axis
_P = 2                # parallel chunks -> lets Mosaic shard across v7x's 2 TCs
                      # (on 1-TC v5e/v6e this only costs one extra tiny output
                      #  block; verify 2-TC split on v7x with xprof and switch
                      #  to pltpu.CORE_PARALLEL if "parallel" does not shard).


def _v1_loss_kernel(n, steps, tn, mask_needed, pred_ref, targ_ref, out_ref):
    """Process one (6, tn) channels-first tile; accumulate per-lane partial
    losses into the per-chunk resident (1, 1, tn) output block."""
    p = pl.program_id(0)      # parallel chunk id
    k = pl.program_id(1)      # sequential step within the chunk

    @pl.when(k == 0)          # per-chunk accumulator init (inner axis id == 0)
    def _():
        out_ref[...] = jnp.zeros_like(out_ref)

    # Per-row loads straight from the refs (cheap vld; avoids sublane shuffles
    # of a loaded (6, tn) value).  Upcast to f32 for the math (no-op for f32).
    pred_loc = pred_ref[0:4, :].astype(jnp.float32)       # (4, tn)
    targ_loc = targ_ref[0:4, :].astype(jnp.float32)       # (4, tn)
    a = pred_ref[4:5, :].astype(jnp.float32)              # (1, tn)
    b = pred_ref[5:6, :].astype(jnp.float32)              # (1, tn)
    ya = targ_ref[4:5, :].astype(jnp.float32)             # (1, tn)
    yb = targ_ref[5:6, :].astype(jnp.float32)             # (1, tn)

    pos = (yb > 0.0).astype(jnp.float32)                  # (1, tn)

    # ---- localization: smooth L1 (beta = 1), masked by pos -----------------
    d = pred_loc - targ_loc
    ad = jnp.abs(d)
    sl1 = jnp.where(ad < 1.0, 0.5 * d * d, ad - 0.5)      # (4, tn)
    loc = jnp.sum(sl1, axis=0, keepdims=True)             # (1, tn)  XLU reduce

    # ---- classification: 2-class log-softmax via a single softplus ---------
    #   log_softmax(a) = -softplus(b - a);  log_softmax(b) = (b-a) - softplus(b-a)
    delta = b - a
    sp = jnp.maximum(delta, 0.0) + jnp.log1p(jnp.exp(-jnp.abs(delta)))
    ce = ya * sp + yb * (sp - delta)                       # (1, tn) = -y*log_softmax

    w = 0.025 + 0.975 * pos                                # 1.0 (pos) / 0.025 (neg)
    contrib = 10.0 * (loc * pos) + ce * w                  # (1, tn) per-lane partials

    if mask_needed:
        # Single end-of-pipe mask for ragged edge blocks and clamped redundant
        # tiles.  NOTE: correctness here relies on TPU vselect not propagating
        # NaN/Inf from the unselected branch (it does not), so running exp/log
        # on undefined edge-block data above is safe; masked lanes add exactly 0.
        col0 = (p * steps + k) * tn
        lane = jax.lax.broadcasted_iota(jnp.int32, (1, tn), 1)
        valid = (lane + col0) < n
        contrib = jnp.where(valid, contrib, 0.0)

    out_ref[...] += contrib[None]                          # (1, 1, tn)


def _lane_tile(n):
    if n < 128:
        return n                            # full-extent lane block (== array dim)
    return min(_TN_MAX, (n // 128) * 128)   # multiple of 128, never exceeds array


def v1_loss_channels_first(pred_cf, targ_cf):
    """pred_cf, targ_cf: channels-first (6, N) arrays -> scalar f32 loss.

    Preferred entry point: avoids the (N, 6) -> (6, N) relayout that otherwise
    dominates the end-to-end HBM traffic of this memory-bound op."""
    c, n = pred_cf.shape
    assert c == 6 and targ_cf.shape == pred_cf.shape

    tn = _lane_tile(n)
    t_tiles = -(-n // tn)                   # total lane tiles
    steps = -(-t_tiles // _P)               # sequential steps per parallel chunk
    # Mask only when there is a ragged tail or a clamped redundant tile;
    # otherwise the mask is compiled out (saves iota/compare/select per step).
    mask_needed = (n % tn != 0) or (t_tiles != _P * steps)

    def in_index(pidx, kidx):
        tile = pidx * steps + kidx
        # Clamp redundant trailing tiles of the last chunk onto a real tile;
        # their contribution is fully masked to 0 inside the kernel.
        return (0, jnp.minimum(tile, t_tiles - 1))

    out = pl.pallas_call(
        functools.partial(_v1_loss_kernel, n, steps, tn, mask_needed),
        out_shape=jax.ShapeDtypeStruct((_P, 1, tn), jnp.float32),
        grid_spec=pltpu.PrefetchScalarGridSpec(
            num_scalar_prefetch=0,
            grid=(_P, steps),
            in_specs=[
                pl.BlockSpec((6, tn), in_index),
                pl.BlockSpec((6, tn), in_index),
            ],
            out_specs=pl.BlockSpec((1, 1, tn), lambda pidx, kidx: (pidx, 0, 0)),
        ),
        compiler_params=pltpu.CompilerParams(
            dimension_semantics=("parallel", "arbitrary"),
        ),
    )(pred_cf, targ_cf)

    # Single final reduction of the per-chunk / per-lane partial sums.
    return jnp.sum(out)


@jax.jit
def v1_loss(pred_tensor, target_tensor):
    """pred_tensor, target_tensor: (B, D1, D2, 6) arrays -> scalar loss."""
    B, D1, D2, C = pred_tensor.shape
    assert C == 6 and target_tensor.shape == pred_tensor.shape
    n = B * D1 * D2

    # Relayout to channels-first (6, N) so locations land on the lane axis.
    # NOTE: this transpose is a full extra XLA HBM read+write pass over both
    # tensors and is the dominant end-to-end cost (~3x the kernel's own
    # traffic).  If the producer can emit (6, N) data, call
    # v1_loss_channels_first directly and skip it.
    # TODO(synk): fuse this loss into the producer's epilogue to drop the
    # relayout entirely (not possible in this self-contained script).
    p = pred_tensor.reshape(n, 6).T
    t = target_tensor.reshape(n, 6).T
    return v1_loss_channels_first(p, t)


def _v1_loss_ref(pred, target):
    """Pure-JAX reference mirroring the PyTorch forward."""
    pred_loc, pred_con = pred[..., :4], pred[..., 4:6]
    targ_loc, targ_con = target[..., :4], target[..., 4:6]
    pos = (target[..., 5] > 0).astype(jnp.float32)[..., None]

    diff = pred_loc - targ_loc
    adiff = jnp.abs(diff)
    sl1 = jnp.where(adiff < 1.0, 0.5 * diff * diff, adiff - 0.5)
    loss_smooth_l1 = jnp.sum(sl1 * pos)

    log_yhat = jax.nn.log_softmax(pred_con, axis=-1)
    ce = -targ_con * log_yhat
    pos_clf = jnp.sum(ce * pos)
    neg_clf = jnp.sum(ce * (1.0 - pos))
    return 10.0 * loss_smooth_l1 + pos_clf + 0.025 * neg_clf


def _make_inputs(key, B, D1, D2):
    k1, k2, k3 = jax.random.split(key, 3)
    pred = jax.random.normal(k1, (B, D1, D2, 6), dtype=jnp.float32)
    targ_loc = jax.random.normal(k2, (B, D1, D2, 4), dtype=jnp.float32)
    # confidence targets: roughly half positive (channel 5 > 0 marks positives)
    pos_flag = (jax.random.uniform(k3, (B, D1, D2, 1)) > 0.5).astype(jnp.float32)
    targ_con = jnp.concatenate([1.0 - pos_flag, pos_flag], axis=-1)
    target = jnp.concatenate([targ_loc, targ_con], axis=-1)
    return pred, target


if __name__ == "__main__":
    key = jax.random.PRNGKey(0)
    kA, kB = jax.random.split(key)

    # exact-multiple case (N = 128, mask compiled out) and ragged case
    # (N = 260, exercises the end-of-pipe tail mask plus the clamped redundant
    # tile of the second parallel chunk).
    for k, (B, D1, D2) in ((kA, (2, 8, 8)), (kB, (2, 10, 13))):
        pred, target = _make_inputs(k, B, D1, D2)
        out = v1_loss(pred, target)
        jax.block_until_ready(out)
        ref = _v1_loss_ref(pred, target)
        np.testing.assert_allclose(np.asarray(out), np.asarray(ref),
                                   rtol=1e-4, atol=1e-3)

    print("KERNEL_OK")
</pallas_src>

<mosaic_0001>
module attributes {stable_mosaic.version = 11 : i64} {
  func.func @_v1_loss_kernel(%arg0: i32, %arg1: i32, %arg2: memref<6x128xf32, #tpu.memory_space<vmem>>, %arg3: memref<6x128xf32, #tpu.memory_space<vmem>>, %arg4: memref<1x1x128xf32, #tpu.memory_space<vmem>>) attributes {dimension_semantics = [#tpu.dimension_semantics<parallel>, #tpu.dimension_semantics<arbitrary>], iteration_bounds = array<i64: 2, 1>, scalar_prefetch = 0 : i64, scratch_operands = 0 : i64, tpu.core_type = #tpu.core_type<tc>, window_params = [{transform_indices = @transform_0, window_bounds = array<i64: 6, 128>}, {transform_indices = @transform_1, window_bounds = array<i64: 6, 128>}, {transform_indices = @transform_2, window_bounds = array<i64: 1, 1, 128>}]} {
    %c0_i32 = arith.constant 0 : i32
    %0 = arith.cmpi eq, %arg1, %c0_i32 : i32
    %1 = arith.extui %0 : i1 to i32
    %c0_i32_0 = arith.constant 0 : i32
    %2 = arith.cmpi ne, %1, %c0_i32_0 : i32
    scf.if %2 {
      %cst_27 = arith.constant 0.000000e+00 : f32
      %61 = vector.broadcast %cst_27 : f32 to vector<1x1x128xf32>
      %c0_28 = arith.constant 0 : index
      %c0_29 = arith.constant 0 : index
      %c0_30 = arith.constant 0 : index
      %62 = vector.load %arg4[%c0_28, %c0_29, %c0_30] : memref<1x1x128xf32, #tpu.memory_space<vmem>>, vector<1x1x128xf32>
      tpu.vector_store %arg4[%c0_28, %c0_29, %c0_30], %61 {strides = array<i32>} : memref<1x1x128xf32, #tpu.memory_space<vmem>>, vector<1x1x128xf32>,
    } else {
    }
    %c0 = arith.constant 0 : index
    %c0_1 = arith.constant 0 : index
    %3 = vector.load %arg2[%c0, %c0_1] : memref<6x128xf32, #tpu.memory_space<vmem>>, vector<4x128xf32>
    %c0_2 = arith.constant 0 : index
    %c0_3 = arith.constant 0 : index
    %4 = vector.load %arg3[%c0_2, %c0_3] : memref<6x128xf32, #tpu.memory_space<vmem>>, vector<4x128xf32>
    %c4 = arith.constant 4 : index
    %c0_4 = arith.constant 0 : index
    %5 = vector.load %arg2[%c4, %c0_4] : memref<6x128xf32, #tpu.memory_space<vmem>>, vector<1x128xf32>
    %c5 = arith.constant 5 : index
    %c0_5 = arith.constant 0 : index
    %6 = vector.load %arg2[%c5, %c0_5] : memref<6x128xf32, #tpu.memory_space<vmem>>, vector<1x128xf32>
    %c4_6 = arith.constant 4 : index
    %c0_7 = arith.constant 0 : index
    %7 = vector.load %arg3[%c4_6, %c0_7] : memref<6x128xf32, #tpu.memory_space<vmem>>, vector<1x128xf32>
    %c5_8 = arith.constant 5 : index
    %c0_9 = arith.constant 0 : index
    %8 = vector.load %arg3[%c5_8, %c0_9] : memref<6x128xf32, #tpu.memory_space<vmem>>, vector<1x128xf32>
    %cst = arith.constant 0.000000e+00 : f32
    %9 = vector.broadcast %cst : f32 to vector<1x128xf32>
    %10 = arith.cmpf ogt, %8, %9 : vector<1x128xf32>
    %11 = arith.extui %10 : vector<1x128xi1> to vector<1x128xi32>
    %12 = arith.sitofp %11 : vector<1x128xi32> to vector<1x128xf32>
    %13 = arith.subf %3, %4 : vector<4x128xf32>
    %14 = math.absf %13 : vector<4x128xf32>
    %cst_10 = arith.constant 1.000000e+00 : f32
    %15 = vector.broadcast %cst_10 : f32 to vector<4x128xf32>
    %16 = arith.cmpf olt, %14, %15 : vector<4x128xf32>
    %cst_11 = arith.constant 5.000000e-01 : f32
    %17 = vector.broadcast %cst_11 : f32 to vector<4x128xf32>
    %18 = arith.mulf %17, %13 : vector<4x128xf32>
    %19 = arith.mulf %18, %13 : vector<4x128xf32>
    %cst_12 = arith.constant 5.000000e-01 : f32
    %20 = vector.broadcast %cst_12 : f32 to vector<4x128xf32>
    %21 = arith.subf %14, %20 : vector<4x128xf32>
    %22 = arith.select %16, %19, %21 : vector<4x128xi1>, vector<4x128xf32>
    %cst_13 = arith.constant dense<0.000000e+00> : vector<128xf32>
    %23 = vector.multi_reduction <add>, %22, %cst_13 [0] : vector<4x128xf32> to vector<128xf32>
    %24 = vector.shape_cast %23 : vector<128xf32> to vector<1x128xf32>
    %25 = arith.subf %6, %5 : vector<1x128xf32>
    %cst_14 = arith.constant 0.000000e+00 : f32
    %26 = vector.broadcast %cst_14 : f32 to vector<1x128xf32>
    %27 = arith.maximumf %25, %26 : vector<1x128xf32>
    %28 = math.absf %25 : vector<1x128xf32>
    %cst_15 = arith.constant 0.000000e+00 : f32
    %29 = vector.broadcast %cst_15 : f32 to vector<1x128xf32>
    %30 = arith.subf %29, %28 : vector<1x128xf32>
    %31 = math.exp %30 : vector<1x128xf32>
    %32 = math.log1p %31 : vector<1x128xf32>
    %33 = arith.addf %27, %32 : vector<1x128xf32>
    %34 = arith.mulf %7, %33 : vector<1x128xf32>
    %35 = arith.subf %33, %25 : vector<1x128xf32>
    %36 = arith.mulf %8, %35 : vector<1x128xf32>
    %37 = arith.addf %34, %36 : vector<1x128xf32>
    %cst_16 = arith.constant 9.750000e-01 : f32
    %38 = vector.broadcast %cst_16 : f32 to vector<1x128xf32>
    %39 = arith.mulf %38, %12 : vector<1x128xf32>
    %cst_17 = arith.constant 2.500000e-02 : f32
    %40 = vector.broadcast %cst_17 : f32 to vector<1x128xf32>
    %41 = arith.addf %40, %39 : vector<1x128xf32>
    %42 = arith.mulf %24, %12 : vector<1x128xf32>
    %cst_18 = arith.constant 1.000000e+01 : f32
    %43 = vector.broadcast %cst_18 : f32 to vector<1x128xf32>
    %44 = arith.mulf %43, %42 : vector<1x128xf32>
    %45 = arith.mulf %37, %41 : vector<1x128xf32>
    %46 = arith.addf %44, %45 : vector<1x128xf32>
    %c1_i32 = arith.constant 1 : i32
    %47 = arith.muli %arg0, %c1_i32 : i32
    %48 = arith.addi %47, %arg1 : i32
    %c128_i32 = arith.constant 128 : i32
    %49 = arith.muli %48, %c128_i32 : i32
    %50 = tpu.iota {dimensions = array<i32: 1>} : vector<1x128xi32>
    %51 = vector.broadcast %49 : i32 to vector<1x128xi32>
    %52 = arith.addi %50, %51 : vector<1x128xi32>
    %c128_i32_19 = arith.constant 128 : i32
    %53 = vector.broadcast %c128_i32_19 : i32 to vector<1x128xi32>
    %54 = arith.cmpi slt, %52, %53 : vector<1x128xi32>
    %cst_20 = arith.constant 0.000000e+00 : f32
    %55 = vector.broadcast %cst_20 : f32 to vector<1x128xf32>
    %56 = arith.select %54, %46, %55 : vector<1x128xi1>, vector<1x128xf32>
    %c0_21 = arith.constant 0 : index
    %c0_22 = arith.constant 0 : index
    %c0_23 = arith.constant 0 : index
    %57 = vector.load %arg4[%c0_21, %c0_22, %c0_23] : memref<1x1x128xf32, #tpu.memory_space<vmem>>, vector<1x1x128xf32>
    %58 = vector.shape_cast %56 : vector<1x128xf32> to vector<1x1x128xf32>
    %59 = arith.addf %57, %58 : vector<1x1x128xf32>
    %c0_24 = arith.constant 0 : index
    %c0_25 = arith.constant 0 : index
    %c0_26 = arith.constant 0 : index
    %60 = vector.load %arg4[%c0_24, %c0_25, %c0_26] : memref<1x1x128xf32, #tpu.memory_space<vmem>>, vector<1x1x128xf32>
    tpu.vector_store %arg4[%c0_24, %c0_25, %c0_26], %59 {strides = array<i32>} : memref<1x1x128xf32, #tpu.memory_space<vmem>>, vector<1x1x128xf32>,
    return
  }
  func.func @transform_0(%arg0: i32, %arg1: i32) -> (i32, i32) {
    %c1_i32 = arith.constant 1 : i32
    %0 = arith.muli %arg0, %c1_i32 : i32
    %1 = arith.addi %0, %arg1 : i32
    %c0_i32 = arith.constant 0 : i32
    %2 = arith.minsi %1, %c0_i32 : i32
    %c0_i32_0 = arith.constant 0 : i32
    %c0_i32_1 = arith.constant 0 : i32
    return %c0_i32_0, %2 : i32, i32
  }
  func.func @transform_1(%arg0: i32, %arg1: i32) -> (i32, i32) {
    %c1_i32 = arith.constant 1 : i32
    %0 = arith.muli %arg0, %c1_i32 : i32
    %1 = arith.addi %0, %arg1 : i32
    %c0_i32 = arith.constant 0 : i32
    %2 = arith.minsi %1, %c0_i32 : i32
    %c0_i32_0 = arith.constant 0 : i32
    %c0_i32_1 = arith.constant 0 : i32
    return %c0_i32_0, %2 : i32, i32
  }
  func.func @transform_2(%arg0: i32, %arg1: i32) -> (i32, i32, i32) {
    %c0_i32 = arith.constant 0 : i32
    %c0_i32_0 = arith.constant 0 : i32
    %c0_i32_1 = arith.constant 0 : i32
    return %arg0, %c0_i32, %c0_i32_0 : i32, i32, i32
  }
}

</mosaic_0001>

<llo_original>
// kernel: v1_loss.1
$region0: #{v1_loss.1}
  #allocation0 [shape = 'u32[]', space=smem, size = 0x4, offset = 0x4, fixed_abs, tag = 'smem constant byte address 0x4 - core index']
  #allocation1 [shape = 'u32[144,128]{1,0:T(1,128)}', space=vmem, size = 0x12000, scoped, tag = 'internal scratch']
  %s0 = inlined_call_operand.vmem [shape: f32[6,128], index: 0, kind: input, shape index: {}]
  %s1 = inlined_call_operand.vmem [shape: f32[6,128], index: 1, kind: input, shape index: {}]
  %s2 = inlined_call_operand.vmem [shape: f32[2,1,128], index: 2, kind: output, shape index: {}]
  %s3 = sld [smem:[#allocation0]]
  $region45: #{v1_loss.1} parent=0
    _
  %s5 = ssub.s32 1, %s3
  %s6 = scalar_select 0, %s5, %s3
  loop: start=0, step=1, limit=4
  $region2: #{v1_loss.1} parent=0 // loop_pre_header
    _
  $region3: #{v1_loss.1} parent=0 // loop_header
    %s8 = sphi 0, %s12
    %p9 = scmp.ge.s32.totalorder %s8, 4
    %s15 = sphi 0, %s27
    %s16 = sphi 0, %s23
    %s17 = sphi 0, %s15
    %s18 = sphi 0, %s16
    %s19 = sphi 0, %s17
    %s20 = sphi 0, %s18
    %s36 = sphi 0, %s38
    %s39 = sphi 0, %s36
    %s40 = sphi 0, %s39
    %s56 = sphi 0, %s40
    %s68 = sphi 0, %s70
    %s71 = sphi 0, %s68
    %s72 = sphi 0, %s71
    %s88 = sphi 0, %s72
    %s94 = sphi 0, %s96
    %s97 = sphi 0, %s94
    %s98 = sphi 0, %s97
    %s114 = sphi 0, %s98
  $region4: #{v1_loss.1} parent=0 // loop_header_branch
    %11 = sbr.rel (%p9) target = $region8
  $region5: #{v1_loss.1} parent=0 // loop_body
    %s13 = ssub.s32 %s8, 1
    %s14 = ssub.s32 %s8, 2
    %s21 = sadd.s32 1, %s16
    %p22 = scmp.ge.s32.totalorder %s21, 1
    %s23 = scalar_select %p22, 0, %s21
    %s24 = sadd.s32 1, %s15
    %s25 = scalar_select %p22, %s24, %s15
    %p26 = scmp.ge.s32.totalorder %s25, 2
    %s27 = scalar_select %p26, 0, %s25
    %s28 = sadd.s32 %s15, %s16
    %p29 = scmp.lt.s32.totalorder %s28, 0
    %s30 = scalar_select %p29, %s28, 0
    %s31 = sadd.s32 %s27, %s23
    %p32 = scmp.lt.s32.totalorder %s31, 0
    %s33 = scalar_select %p32, %s31, 0
    %s34 = ssub.s32 %s30, %s33
    %p35 = scmp.eq.s32.totalorder %s34, 0
    %s37 = sadd.s32 %s36, 1
    %s38 = scalar_select %p35, %s36, %s37
    %p41 = pneg %p35
    %p42 = scmp.eq.s32.totalorder %s8, 1
    %p43 = por %p41, %p42
    %p44 = scmp.ne.s32.totalorder %s36, %s39
    %p45 = scmp.eq.s32.totalorder %s8, 0
    %p46 = por %p44, %p45
    %p47 = scmp.ne.s32.totalorder %s36, %s39
    %p48 = scmp.eq.s32.totalorder %s13, 1
    %p49 = por %p47, %p48
    %p50 = scmp.ne.s32.totalorder %s39, %s40
    %p51 = scmp.eq.s32.totalorder %s13, 0
    %p52 = por %p50, %p51
    %p53 = scmp.ne.s32.totalorder %s39, %s40
    %p54 = scmp.eq.s32.totalorder %s14, 1
    %p55 = por %p53, %p54
    %p57 = scmp.ne.s32.totalorder %s40, %s56
    %p58 = scmp.eq.s32.totalorder %s14, 0
    %p59 = por %p57, %p58
    %s60 = sadd.s32 %s15, %s16
    %p61 = scmp.lt.s32.totalorder %s60, 0
    %s62 = scalar_select %p61, %s60, 0
    %s63 = sadd.s32 %s27, %s23
    %p64 = scmp.lt.s32.totalorder %s63, 0
    %s65 = scalar_select %p64, %s63, 0
    %s66 = ssub.s32 %s62, %s65
    %p67 = scmp.eq.s32.totalorder %s66, 0
    %s69 = sadd.s32 %s68, 1
    %s70 = scalar_select %p67, %s68, %s69
    %p73 = pneg %p67
    %p74 = scmp.eq.s32.totalorder %s8, 1
    %p75 = por %p73, %p74
    %p76 = scmp.ne.s32.totalorder %s68, %s71
    %p77 = scmp.eq.s32.totalorder %s8, 0
    %p78 = por %p76, %p77
    %p79 = scmp.ne.s32.totalorder %s68, %s71
    %p80 = scmp.eq.s32.totalorder %s13, 1
    %p81 = por %p79, %p80
    %p82 = scmp.ne.s32.totalorder %s71, %s72
    %p83 = scmp.eq.s32.totalorder %s13, 0
    %p84 = por %p82, %p83
    %p85 = scmp.ne.s32.totalorder %s71, %s72
    %p86 = scmp.eq.s32.totalorder %s14, 1
    %p87 = por %p85, %p86
    %p89 = scmp.ne.s32.totalorder %s72, %s88
    %p90 = scmp.eq.s32.totalorder %s14, 0
    %p91 = por %p89, %p90
    %s92 = ssub.s32 %s15, %s27
    %p93 = scmp.eq.s32.totalorder %s92, 0
    %s95 = sadd.s32 %s94, 1
    %s96 = scalar_select %p93, %s94, %s95
    %p99 = pneg %p93
    %p100 = scmp.eq.s32.totalorder %s8, 1
    %p101 = por %p99, %p100
    %p102 = scmp.ne.s32.totalorder %s94, %s97
    %p103 = scmp.eq.s32.totalorder %s8, 0
    %p104 = por %p102, %p103
    %p105 = scmp.ne.s32.totalorder %s94, %s97
    %p106 = scmp.eq.s32.totalorder %s13, 1
    %p107 = por %p105, %p106
    %p108 = scmp.ne.s32.totalorder %s97, %s98
    %p109 = scmp.eq.s32.totalorder %s13, 0
    %p110 = por %p108, %p109
    %p111 = scmp.ne.s32.totalorder %s97, %s98
    %p112 = scmp.eq.s32.totalorder %s14, 1
    %p113 = por %p111, %p112
    %p115 = scmp.ne.s32.totalorder %s98, %s114
    %p116 = scmp.eq.s32.totalorder %s14, 0
    %p117 = por %p115, %p116
    %p118 = scmp.le.s32.totalorder 1, %s8
    %p119 = scmp.lt.s32.totalorder %s8, 3
    %p120 = pnand %p118, %p119
    %p121 = pneg %p120
    // Predicated region
    $region9: #{v1_loss.1} parent=5 // pred_check
      _
    $region10: #{v1_loss.1} parent=5 // pred_check_branch
      %123 = sbr.rel (%p120) target = $region12
    $region11: #{v1_loss.1} parent=5 // pred_region
      %s124 = ssub.s32 %s8, 1
    $region12: #{v1_loss.1} parent=5 // pred_fallthru
      _
    %p125 = scmp.lt.s32.totalorder %s8, 2
    // Predicated region
    $region13: #{v1_loss.1} parent=5 // pred_check
      %p126 = pneg %p125
    $region14: #{v1_loss.1} parent=5 // pred_check_branch
      %128 = sbr.rel (%p126) target = $region16
    $region15: #{v1_loss.1} parent=5 // pred_region
      // Predicated region
      $region17: #{v1_loss.1} parent=15 // pred_check
        %p129 = pneg %p46
      $region18: #{v1_loss.1} parent=15 // pred_check_branch
        %131 = sbr.rel (%p129) target = $region20
      $region19: #{v1_loss.1} parent=15 // pred_region
        %s132 = sadd.s32 %s15, %s16
        %p133 = scmp.lt.s32.totalorder %s132, 0
        %s134 = scalar_select %p133, %s132, 0
        %p135 = scmp.lt.s32.totalorder %s134, 0
        %s136 = scalar_select %p135, %s134, 0
        %s137 = smul.addr %s136, 8
        %s138 = scalar_lea.vmem %s0, %s137
        %s139 = sadd.s32 %s15, %s16
        %p140 = scmp.lt.s32.totalorder %s139, 0
        %s141 = scalar_select %p140, %s139, 0
      $region20: #{v1_loss.1} parent=15 // pred_fallthru
        _
      // Predicated region
      $region21: #{v1_loss.1} parent=15 // pred_check
        %p142 = pneg %p78
      $region22: #{v1_loss.1} parent=15 // pred_check_branch
        %144 = sbr.rel (%p142) target = $region24
      $region23: #{v1_loss.1} parent=15 // pred_region
        %s145 = sadd.s32 %s15, %s16
        %p146 = scmp.lt.s32.totalorder %s145, 0
        %s147 = scalar_select %p146, %s145, 0
        %p148 = scmp.lt.s32.totalorder %s147, 0
        %s149 = scalar_select %p148, %s147, 0
        %s150 = smul.addr %s149, 8
        %s151 = scalar_lea.vmem %s1, %s150
        %s152 = sadd.s32 %s15, %s16
        %p153 = scmp.lt.s32.totalorder %s152, 0
        %s154 = scalar_select %p153, %s152, 0
      $region24: #{v1_loss.1} parent=15 // pred_fallthru
        _
    $region16: #{v1_loss.1} parent=5 // pred_fallthru
      _
    %p155 = scmp.le.s32.totalorder 1, %s8
    %p156 = scmp.lt.s32.totalorder %s8, 3
    %p157 = pnand %p155, %p156
    %p158 = pneg %p157
    // Predicated region
    $region25: #{v1_loss.1} parent=5 // pred_check
      _
    $region26: #{v1_loss.1} parent=5 // pred_check_branch
      %160 = sbr.rel (%p157) target = $region28
    $region27: #{v1_loss.1} parent=5 // pred_region
      %s161 = ssub.s32 %s8, 1
      %s162 = sadd.s32 %s17, %s18
      %p163 = scmp.lt.s32.totalorder %s162, 0
      %s164 = scalar_select %p163, %s162, 0
      %p165 = scmp.lt.s32.totalorder %s164, 0
      %s166 = scalar_select %p165, %s164, 0
      %s167 = smul.addr %s166, 8
      %s168 = scalar_lea.vmem %s0, %s167
      %p169 = pneg %p52
      %p170 = pneg %p49
      %s171 = sadd.s32 %s17, %s18
      %p172 = scmp.lt.s32.totalorder %s171, 0
      %s173 = scalar_select %p172, %s171, 0
      %p174 = scmp.lt.s32.totalorder %s173, 0
      %s175 = scalar_select %p174, %s173, 0
      %s176 = smul.addr %s175, 8
      %s177 = scalar_lea.vmem %s1, %s176
      %p178 = pneg %p84
      %p179 = pneg %p81
      %p180 = pneg %p110
      %p181 = pneg %p107
      %p182 = scmp.lt.s32.totalorder %s17, 1
      %s183 = scalar_select %p182, %s17, 1
      %s184 = scalar_lea.vmem %s2, %s183
      %s185 = sadd.s32 %s17, %s18
      %p186 = scmp.lt.s32.totalorder %s185, 0
      %s187 = scalar_select %p186, %s185, 0
      %p188 = scmp.lt.s32.totalorder %s187, 0
      %s189 = scalar_select %p188, %s187, 0
      %s190 = smul.addr %s189, 8
      %s191 = scalar_lea.vmem %s0, %s190
      %s192 = sadd.s32 %s17, %s18
      %p193 = scmp.lt.s32.totalorder %s192, 0
      %s194 = scalar_select %p193, %s192, 0
      %s195 = sadd.s32 %s17, %s18
      %p196 = scmp.lt.s32.totalorder %s195, 0
      %s197 = scalar_select %p196, %s195, 0
      %p198 = scmp.lt.s32.totalorder %s197, 0
      %s199 = scalar_select %p198, %s197, 0
      %s200 = smul.addr %s199, 8
      %s201 = scalar_lea.vmem %s1, %s200
      %s202 = sadd.s32 %s17, %s18
      %p203 = scmp.lt.s32.totalorder %s202, 0
      %s204 = scalar_select %p203, %s202, 0
      %p205 = scmp.lt.s32.totalorder %s17, 1
      %s206 = scalar_select %p205, %s17, 1
      %s207 = scalar_lea.vmem %s2, %s206
      %p208 = scmp.eq.s32.totalorder %s18, 0
      // Predicated region
      $region29: #{v1_loss.1} parent=27 // pred_check
        %p209 = pneg %p208
      $region30: #{v1_loss.1} parent=27 // pred_check_branch
        %211 = sbr.rel (%p209) target = $region32
      $region31: #{v1_loss.1} parent=27 // pred_region
        %212 = vst [vmem:[%s207] sm:$0x1] 0.0
      $region32: #{v1_loss.1} parent=27 // pred_fallthru
        _
      %v213 = vld [vmem:[%s191] sm:$0xf]
      %v214 = vld [vmem:[%s201] sm:$0xf]
      %v215 = vld [vmem:[%s191 + $0x4] sm:$0x1]
      %v216 = vld [vmem:[%s191 + $0x5] sm:$0x1]
      %v217 = vld [vmem:[%s201 + $0x4] sm:$0x1]
      %v218 = vld [vmem:[%s201 + $0x5] sm:$0x1]
      %vm219 = vcmp.gt.f32.partialorder %v218, 0.0
      %v220 = vsel %vm219, 1, 0
      %v221 = vcvt.s32.f32 %v220
      %v222 = vsub.f32 %v213, %v214
      %v223 = vand.u32 2147483647, %v222
      %vm224 = vcmp.lt.f32.partialorder %v223, 1.0
      %v225 = vmul.f32 %v222, 0.5
      %v226 = vmul.f32 %v225, %v222
      %v227 = vsub.f32 %v223, 0.5
      %v228 = vsel %vm224, %v226, %v227
      %vm229 = vcmask 1043456
      %v230 = vsel %vm229, %v228, 0.0
      %v231 = vrot.slane %v230, 4
      %v232 = vadd.f32 %v230, %v231
      %v233 = vrot.slane %v232, 2
      %v234 = vadd.f32 %v232, %v233
      %v235 = vrot.slane %v234, 1
      %v236 = vadd.f32 %v234, %v235
      %v237 = vsub.f32 %v216, %v215
      %v238 = vmax.f32 %v237, 0.0
      %v239 = vand.u32 2147483647, %v237
      %v240 = vsub.f32 0.0, %v239
      %v241 = vmul.f32 %v240, 1.442695
      %v242 = vpow.pop %v241
      %v243 = vadd.f32 %v242, 1.0
      %v244 = vlog2.pop %v243
      %v245 = vmul.f32 %v244, 0.6931472
      %v246 = vmul.f32 -0.5, %v242
      %v247 = vadd.f32 %v246, 1.0
      %v248 = vmul.f32 %v247, %v242
      %v249 = vand.u32 2147483647, %v242
      %vm250 = vcmp.lt.f32.partialorder %v249, 0.0004427343
      %v251 = vsel %vm250, %v248, %v245
      %v252 = vadd.f32 %v238, %v251
      %v253 = vmul.f32 %v217, %v252
      %v254 = vsub.f32 %v252, %v237
      %v255 = vmul.f32 %v218, %v254
      %v256 = vadd.f32 %v253, %v255
      %v257 = vmul.f32 %v221, 0.975
      %v258 = vadd.f32 %v257, 0.025
      %v259 = vmul.f32 %v236, %v221
      %v260 = vmul.f32 %v259, 10.0
      %v261 = vmul.f32 %v256, %v258
      %v262 = vadd.f32 %v260, %v261
      %s263 = sadd.s32 %s17, %s18
      %s264 = smul.u32 %s263, 128
      %v265 = vlaneseq
      %v266 = vand.u32 %v265, 127
      %v267 = vstv %s264
      %v268 = vadd.s32 %v266, %v267
      %vm269 = vcmp.lt.s32.totalorder %v268, 128
      %v270 = vsel %vm269, %v262, 0.0
      %v271 = vld [vmem:[%s207] sm:$0x1]
      %v272 = vadd.f32 %v271, %v270
      %273 = vst [vmem:[%s207] sm:$0x1] %v272
      %p274 = scmp.lt.s32.totalorder %s17, 1
      %s275 = scalar_select %p274, %s17, 1
      %s276 = scalar_lea.vmem %s2, %s275
      // Predicated region
      $region33: #{v1_loss.1} parent=27 // pred_check
        %p277 = pneg %p107
      $region34: #{v1_loss.1} parent=27 // pred_check_branch
        %279 = sbr.rel (%p277) target = $region36
      $region35: #{v1_loss.1} parent=27 // pred_region
        _
      $region36: #{v1_loss.1} parent=27 // pred_fallthru
        _
    $region28: #{v1_loss.1} parent=5 // pred_fallthru
      _
    %p280 = scmp.le.s32.totalorder 2, %s8
    // Predicated region
    $region37: #{v1_loss.1} parent=5 // pred_check
      %p281 = pneg %p280
    $region38: #{v1_loss.1} parent=5 // pred_check_branch
      %283 = sbr.rel (%p281) target = $region40
    $region39: #{v1_loss.1} parent=5 // pred_region
      %s284 = ssub.s32 %s8, 2
      // Predicated region
      $region41: #{v1_loss.1} parent=39 // pred_check
        %p285 = pneg %p113
      $region42: #{v1_loss.1} parent=39 // pred_check_branch
        %287 = sbr.rel (%p285) target = $region44
      $region43: #{v1_loss.1} parent=39 // pred_region
        %p288 = scmp.lt.s32.totalorder %s19, 1
        %s289 = scalar_select %p288, %s19, 1
        %s290 = scalar_lea.vmem %s2, %s289
      $region44: #{v1_loss.1} parent=39 // pred_fallthru
        _
    $region40: #{v1_loss.1} parent=5 // pred_fallthru
      _
  $region6: #{v1_loss.1} parent=0 // loop_footer
    %s12 = sadd.s32 1, %s8
  $region7: #{v1_loss.1} parent=0 // loop_footer_branch
    %7 = sbr.rel target = $region3
  $region8: #{v1_loss.1} parent=0 // loop_exit
    _

</llo_original>
